<compile_context>
chip_gen: v7x
topology: tpu7x:2x2x1
jax: 0.10.0
libtpu: 0.0.40
codegen_flags: <defaults>
</compile_context>

<pallas_src>
import math

import jax
import jax.numpy as jnp
from jax import lax
from jax.experimental import pallas as pl
from jax.experimental.pallas import tpu as pltpu

NEG_INF = -1e30  # large finite negative: exp() underflows to 0, never NaN


# ---------------------------------------------------------------------------
# Kernel 1: fused QKV projection -> head-major bf16 Q/K/V slabs in HBM.
# ---------------------------------------------------------------------------
def make_qkv_proj_kernel(C, H, D, TT):
    def kernel(x_ref, w_ref, b_ref, q_ref, k_ref, v_ref):
        x = x_ref[0]                                               # (TT, C) bf16
        qkv = jnp.dot(x, w_ref[...],
                      preferred_element_type=jnp.float32) + b_ref[...]

        def heads(m):                                              # (TT,C)->(H,TT,D)
            return jnp.swapaxes(m.reshape(TT, H, D), 0, 1)

        q_ref[0] = heads(qkv[:, 0:C]).astype(q_ref.dtype)          # scale folded into Wq/bq
        k_ref[0] = heads(qkv[:, C:2 * C]).astype(k_ref.dtype)
        v_ref[0] = heads(qkv[:, 2 * C:3 * C]).astype(v_ref.dtype)

    return kernel


# ---------------------------------------------------------------------------
# Kernel 2: flash attention (online softmax) + output projection.
# ---------------------------------------------------------------------------
def make_flash_attn_kernel(C, H, D, TQ, TKV):
    def kernel(q_ref, k_ref, v_ref, wp_ref, bp_ref, out_ref,
               m_scr, l_scr, acc_scr):
        qi = pl.program_id(1)
        ki = pl.program_id(2)
        q_start = qi * TQ
        kv_start = ki * TKV
        diag_ki = (q_start + TQ - 1) // TKV            # last KV tile with unmasked cols
        process = ki <= diag_ki                        # skip fully-masked tiles
        needs_mask = kv_start + TKV - 1 > q_start      # tile straddles the diagonal

        # -- once per (batch, q-tile): init online-softmax statistics.
        @pl.when(ki == 0)
        def _init():
            m_scr[...] = jnp.full_like(m_scr, NEG_INF)
            l_scr[...] = jnp.zeros_like(l_scr)
            acc_scr[...] = jnp.zeros_like(acc_scr)

        # -- online-softmax update (mask only applied on diagonal-straddling tiles).
        def flash_update(apply_mask):
            def body():
                q3 = q_ref[0]                                      # (H, TQ, D) bf16
                k3 = k_ref[0]                                      # (H, TKV, D) bf16
                v3 = v_ref[0]                                      # (H, TKV, D) bf16
                s = jnp.einsum("hqd,hkd->hqk", q3, k3,
                               preferred_element_type=jnp.float32)  # (H, TQ, TKV) f32
                if apply_mask:
                    # head-independent (TQ, TKV) mask, broadcast over H
                    row = q_start + lax.broadcasted_iota(jnp.int32, (TQ, TKV), 0)
                    col = kv_start + lax.broadcasted_iota(jnp.int32, (TQ, TKV), 1)
                    s = jnp.where((col <= row)[None, :, :], s, NEG_INF)
                m_prev = m_scr[...]                                # (H, TQ, 1)
                m_new = jnp.maximum(m_prev, jnp.max(s, axis=-1, keepdims=True))
                alpha = jnp.exp(m_prev - m_new)
                p = jnp.exp(s - m_new)                             # f32
                l_scr[...] = alpha * l_scr[...] + jnp.sum(p, axis=-1, keepdims=True)
                acc_scr[...] = alpha * acc_scr[...] + jnp.einsum(
                    "hqk,hkd->hqd", p.astype(jnp.bfloat16), v3,
                    preferred_element_type=jnp.float32)
                m_scr[...] = m_new
            return body

        pl.when(jnp.logical_and(process, needs_mask))(flash_update(True))
        pl.when(jnp.logical_and(process, jnp.logical_not(needs_mask)))(flash_update(False))

        # -- finalize at the diagonal KV tile (trailing masked steps are empty).
        @pl.when(ki == diag_ki)
        def _finalize():
            # approx reciprocal: ~2^-12 rel error; negligible vs bf16 matmul inputs.
            inv_l = pl.reciprocal(l_scr[...], approx=True)
            o = acc_scr[...] * inv_l                               # (H, TQ, D) f32
            y = jnp.swapaxes(o, 0, 1).reshape(TQ, C)               # (TQ, C)
            out = jnp.dot(y.astype(jnp.bfloat16), wp_ref[...],
                          preferred_element_type=jnp.float32) + bp_ref[...]
            out_ref[0] = out.astype(out_ref.dtype)

    return kernel


def _vmem_limit_bytes():
    """Generation-aware VMEM budget: ~3/4 of physical per-core VMEM."""
    try:
        cap = pltpu.get_tpu_info().vmem_capacity_bytes
    except Exception:
        cap = 128 * 1024 * 1024
    return int(max(32 << 20, min((cap * 3) // 4, 112 << 20)))


def causal_self_attention(x, params, n_head, *, q_tile=256, kv_tile=256, proj_tile=256):
    """x: (B, T, C) float32.  params: PyTorch-layout (out, in) weights + biases."""
    B, T, C = x.shape
    assert C % n_head == 0
    H, D = n_head, C // n_head
    TQ, TKV, TT = min(T, q_tile), min(T, kv_tile), min(T, proj_tile)
    assert T % TQ == 0 and T % TKV == 0 and T % TT == 0, "T must divide tile sizes"
    n_q, n_kv, n_t = T // TQ, T // TKV, T // TT

    cdt = jnp.bfloat16                      # MXU-native input dtype; f32 accumulation
    vmem_limit = _vmem_limit_bytes()
    scale = 1.0 / math.sqrt(D)

    x_c = x.astype(cdt)
    # 1/sqrt(D) folded into the Q projection weights/bias (zero in-kernel cost).
    w_qkv = jnp.concatenate(
        [params["wq"].T * scale, params["wk"].T, params["wv"].T], axis=1).astype(cdt)   # (C, 3C)
    b_qkv = jnp.concatenate(
        [params["bq"] * scale, params["bk"], params["bv"]]).reshape(1, 3 * C).astype(jnp.float32)
    wp_t = params["wp"].T.astype(cdt)                                                   # (C, C)
    bp = params["bp"].reshape(1, C).astype(jnp.float32)

    # ---------------- Kernel 1: QKV projection (once per token tile) -------------
    const2 = lambda b, t: (0, 0)
    q_hm, k_hm, v_hm = pl.pallas_call(
        make_qkv_proj_kernel(C, H, D, TT),
        out_shape=(
            jax.ShapeDtypeStruct((B, H, T, D), cdt),
            jax.ShapeDtypeStruct((B, H, T, D), cdt),
            jax.ShapeDtypeStruct((B, H, T, D), cdt),
        ),
        grid_spec=pltpu.PrefetchScalarGridSpec(
            num_scalar_prefetch=0,
            grid=(B, n_t),
            in_specs=[
                pl.BlockSpec((1, TT, C), lambda b, t: (b, t, 0)),   # x token tile
                pl.BlockSpec((C, 3 * C), const2),                   # [Wq*s | Wk | Wv]^T
                pl.BlockSpec((1, 3 * C), const2),                   # [bq*s | bk | bv]
            ],
            out_specs=(
                pl.BlockSpec((1, H, TT, D), lambda b, t: (b, 0, t, 0)),
                pl.BlockSpec((1, H, TT, D), lambda b, t: (b, 0, t, 0)),
                pl.BlockSpec((1, H, TT, D), lambda b, t: (b, 0, t, 0)),
            ),
        ),
        compiler_params=pltpu.CompilerParams(
            dimension_semantics=("parallel", "parallel"),
            vmem_limit_bytes=vmem_limit,
        ),
        cost_estimate=pl.CostEstimate(
            flops=2 * B * T * C * 3 * C,
            transcendentals=0,
            bytes_accessed=B * T * C * 2 + 3 * C * C * 2 + 3 * B * T * C * 2,
        ),
    )(x_c, w_qkv, b_qkv)

    # ---------------- Kernel 2: flash attention + output projection ---------------
    def kv_index_map(b, qi, ki):
        # Clamp to the diagonal KV tile: skipped (fully-masked) iterations reuse
        # the already-resident block, eliding ~half of the K/V HBM traffic.
        diag = ((qi + 1) * TQ - 1) // TKV
        return (b, 0, jnp.minimum(ki, diag), 0)

    const3 = lambda b, qi, ki: (0, 0)

    out = pl.pallas_call(
        make_flash_attn_kernel(C, H, D, TQ, TKV),
        out_shape=jax.ShapeDtypeStruct((B, T, C), jnp.float32),
        grid_spec=pltpu.PrefetchScalarGridSpec(
            num_scalar_prefetch=0,
            grid=(B, n_q, n_kv),
            in_specs=[
                pl.BlockSpec((1, H, TQ, D), lambda b, qi, ki: (b, 0, qi, 0)),  # Q
                pl.BlockSpec((1, H, TKV, D), kv_index_map),                    # K
                pl.BlockSpec((1, H, TKV, D), kv_index_map),                    # V
                pl.BlockSpec((C, C), const3),                                  # Wproj^T
                pl.BlockSpec((1, C), const3),                                  # bproj
            ],
            out_specs=pl.BlockSpec((1, TQ, C), lambda b, qi, ki: (b, qi, 0)),
            scratch_shapes=[
                pltpu.VMEM((H, TQ, 1), jnp.float32),    # running max
                pltpu.VMEM((H, TQ, 1), jnp.float32),    # running sum
                pltpu.VMEM((H, TQ, D), jnp.float32),    # output accumulator
            ],
        ),
        compiler_params=pltpu.CompilerParams(
            dimension_semantics=("parallel", "parallel", "arbitrary"),
            vmem_limit_bytes=vmem_limit,
        ),
        cost_estimate=pl.CostEstimate(
            flops=4 * B * T * T * C + 2 * B * T * C * C,
            transcendentals=B * H * T * T,
            bytes_accessed=3 * B * T * C * 2 + C * C * 2 + B * T * C * 4,
        ),
    )(q_hm, k_hm, v_hm, wp_t, bp)

    return out


def reference(x, params, n_head):
    """Pure-JAX f32 reference mirroring the PyTorch forward (eval mode)."""
    B, T, C = x.shape
    D = C // n_head

    def linear(h, w, b):
        return h @ w.T + b

    q = linear(x, params["wq"], params["bq"]).reshape(B, T, n_head, D).transpose(0, 2, 1, 3)
    k = linear(x, params["wk"], params["bk"]).reshape(B, T, n_head, D).transpose(0, 2, 1, 3)
    v = linear(x, params["wv"], params["bv"]).reshape(B, T, n_head, D).transpose(0, 2, 1, 3)

    att = jnp.einsum("bhqd,bhkd->bhqk", q, k) * (1.0 / math.sqrt(D))
    mask = jnp.tril(jnp.ones((T, T)))
    att = jnp.where(mask == 0, -jnp.inf, att)
    att = jax.nn.softmax(att, axis=-1)
    y = jnp.einsum("bhqk,bhkd->bhqd", att, v)
    y = y.transpose(0, 2, 1, 3).reshape(B, T, C)
    return linear(y, params["wp"], params["bp"])


if __name__ == "__main__":
    # Small, module-consistent shapes: batch=2, seq=8, n_embd=32, n_head=4.
    B, T, C, n_head = 2, 8, 32, 4

    key = jax.random.PRNGKey(0)
    keys = jax.random.split(key, 9)
    init_scale = 0.1
    params = {
        "wq": jax.random.normal(keys[0], (C, C), jnp.float32) * init_scale,
        "bq": jax.random.normal(keys[1], (C,), jnp.float32) * init_scale,
        "wk": jax.random.normal(keys[2], (C, C), jnp.float32) * init_scale,
        "bk": jax.random.normal(keys[3], (C,), jnp.float32) * init_scale,
        "wv": jax.random.normal(keys[4], (C, C), jnp.float32) * init_scale,
        "bv": jax.random.normal(keys[5], (C,), jnp.float32) * init_scale,
        "wp": jax.random.normal(keys[6], (C, C), jnp.float32) * init_scale,
        "bp": jax.random.normal(keys[7], (C,), jnp.float32) * init_scale,
    }
    x = jax.random.normal(keys[8], (B, T, C), jnp.float32)

    out = causal_self_attention(x, params, n_head)
    out = jax.block_until_ready(out)

    ref = reference(x, params, n_head)
    assert out.shape == (B, T, C)
    # bf16 MXU inputs (f32 accumulation) -> looser tolerance than pure-f32.
    assert jnp.allclose(out, ref, atol=3e-2, rtol=3e-2), "mismatch vs reference"

    print("KERNEL_OK")
</pallas_src>

<mosaic_0001>
module attributes {stable_mosaic.version = 11 : i64} {
  func.func @kernel(%arg0: i32, %arg1: i32, %arg2: memref<1x8x32xbf16, #tpu.memory_space<vmem>>, %arg3: memref<32x96xbf16, #tpu.memory_space<vmem>>, %arg4: memref<1x96xf32, #tpu.memory_space<vmem>>, %arg5: memref<1x4x8x8xbf16, #tpu.memory_space<vmem>>, %arg6: memref<1x4x8x8xbf16, #tpu.memory_space<vmem>>, %arg7: memref<1x4x8x8xbf16, #tpu.memory_space<vmem>>) attributes {dimension_semantics = [#tpu.dimension_semantics<parallel>, #tpu.dimension_semantics<parallel>], iteration_bounds = array<i64: 2, 1>, scalar_prefetch = 0 : i64, scratch_operands = 0 : i64, tpu.core_type = #tpu.core_type<tc>, window_params = [{transform_indices = @transform_0, window_bounds = array<i64: 1, 8, 32>}, {pipeline_mode = #tpu.pipeline_mode<synchronous>, transform_indices = @transform_1, window_bounds = array<i64: 32, 96>}, {pipeline_mode = #tpu.pipeline_mode<synchronous>, transform_indices = @transform_2, window_bounds = array<i64: 1, 96>}, {transform_indices = @transform_3, window_bounds = array<i64: 1, 4, 8, 8>}, {transform_indices = @transform_4, window_bounds = array<i64: 1, 4, 8, 8>}, {transform_indices = @transform_5, window_bounds = array<i64: 1, 4, 8, 8>}]} {
    %c0 = arith.constant 0 : index
    %c0_0 = arith.constant 0 : index
    %c0_1 = arith.constant 0 : index
    %0 = vector.load %arg2[%c0, %c0_0, %c0_1] : memref<1x8x32xbf16, #tpu.memory_space<vmem>>, vector<1x8x32xbf16>
    %1 = vector.shape_cast %0 : vector<1x8x32xbf16> to vector<8x32xbf16>
    %c0_2 = arith.constant 0 : index
    %c0_3 = arith.constant 0 : index
    %2 = vector.load %arg3[%c0_2, %c0_3] : memref<32x96xbf16, #tpu.memory_space<vmem>>, vector<32x96xbf16>
    %cst = arith.constant dense<0.000000e+00> : vector<8x96xf32>
    %3 = tpu.matmul %1, %2, %cst {dimension_numbers = #tpu.dot_dimension_numbers<[1], [0], [0], [1], [0, 0, 1, 1], [], []>} : vector<8x32xbf16>, vector<32x96xbf16>, vector<8x96xf32> -> vector<8x96xf32>
    %c0_4 = arith.constant 0 : index
    %c0_5 = arith.constant 0 : index
    %4 = vector.load %arg4[%c0_4, %c0_5] : memref<1x96xf32, #tpu.memory_space<vmem>>, vector<1x96xf32>
    %5 = vector.broadcast %4 : vector<1x96xf32> to vector<8x96xf32>
    %6 = arith.addf %3, %5 : vector<8x96xf32>
    %7 = vector.extract_strided_slice %6 {offsets = [0, 0], sizes = [8, 32], strides = [1, 1]} : vector<8x96xf32> to vector<8x32xf32>
    %8 = vector.shape_cast %7 : vector<8x32xf32> to vector<8x4x8xf32>
    %9 = tpu.transpose %8, [1, 0, 2] : vector<8x4x8xf32> -> vector<4x8x8xf32>
    %10 = arith.truncf %9 : vector<4x8x8xf32> to vector<4x8x8xbf16>
    %c0_6 = arith.constant 0 : index
    %c0_7 = arith.constant 0 : index
    %c0_8 = arith.constant 0 : index
    %c0_9 = arith.constant 0 : index
    %11 = vector.load %arg5[%c0_6, %c0_7, %c0_8, %c0_9] : memref<1x4x8x8xbf16, #tpu.memory_space<vmem>>, vector<1x4x8x8xbf16>
    %12 = vector.shape_cast %11 : vector<1x4x8x8xbf16> to vector<4x8x8xbf16>
    %13 = vector.shape_cast %10 : vector<4x8x8xbf16> to vector<1x4x8x8xbf16>
    tpu.vector_store %arg5[%c0_6, %c0_7, %c0_8, %c0_9], %13 {strides = array<i32>} : memref<1x4x8x8xbf16, #tpu.memory_space<vmem>>, vector<1x4x8x8xbf16>,
    %14 = vector.extract_strided_slice %6 {offsets = [0, 32], sizes = [8, 32], strides = [1, 1]} : vector<8x96xf32> to vector<8x32xf32>
    %15 = vector.shape_cast %14 : vector<8x32xf32> to vector<8x4x8xf32>
    %16 = tpu.transpose %15, [1, 0, 2] : vector<8x4x8xf32> -> vector<4x8x8xf32>
    %17 = arith.truncf %16 : vector<4x8x8xf32> to vector<4x8x8xbf16>
    %c0_10 = arith.constant 0 : index
    %c0_11 = arith.constant 0 : index
    %c0_12 = arith.constant 0 : index
    %c0_13 = arith.constant 0 : index
    %18 = vector.load %arg6[%c0_10, %c0_11, %c0_12, %c0_13] : memref<1x4x8x8xbf16, #tpu.memory_space<vmem>>, vector<1x4x8x8xbf16>
    %19 = vector.shape_cast %18 : vector<1x4x8x8xbf16> to vector<4x8x8xbf16>
    %20 = vector.shape_cast %17 : vector<4x8x8xbf16> to vector<1x4x8x8xbf16>
    tpu.vector_store %arg6[%c0_10, %c0_11, %c0_12, %c0_13], %20 {strides = array<i32>} : memref<1x4x8x8xbf16, #tpu.memory_space<vmem>>, vector<1x4x8x8xbf16>,
    %21 = vector.extract_strided_slice %6 {offsets = [0, 64], sizes = [8, 32], strides = [1, 1]} : vector<8x96xf32> to vector<8x32xf32>
    %22 = vector.shape_cast %21 : vector<8x32xf32> to vector<8x4x8xf32>
    %23 = tpu.transpose %22, [1, 0, 2] : vector<8x4x8xf32> -> vector<4x8x8xf32>
    %24 = arith.truncf %23 : vector<4x8x8xf32> to vector<4x8x8xbf16>
    %c0_14 = arith.constant 0 : index
    %c0_15 = arith.constant 0 : index
    %c0_16 = arith.constant 0 : index
    %c0_17 = arith.constant 0 : index
    %25 = vector.load %arg7[%c0_14, %c0_15, %c0_16, %c0_17] : memref<1x4x8x8xbf16, #tpu.memory_space<vmem>>, vector<1x4x8x8xbf16>
    %26 = vector.shape_cast %25 : vector<1x4x8x8xbf16> to vector<4x8x8xbf16>
    %27 = vector.shape_cast %24 : vector<4x8x8xbf16> to vector<1x4x8x8xbf16>
    tpu.vector_store %arg7[%c0_14, %c0_15, %c0_16, %c0_17], %27 {strides = array<i32>} : memref<1x4x8x8xbf16, #tpu.memory_space<vmem>>, vector<1x4x8x8xbf16>,
    return
  }
  func.func @transform_0(%arg0: i32, %arg1: i32) -> (i32, i32, i32) {
    %c0_i32 = arith.constant 0 : i32
    %c0_i32_0 = arith.constant 0 : i32
    return %arg0, %arg1, %c0_i32 : i32, i32, i32
  }
  func.func @transform_1(%arg0: i32, %arg1: i32) -> (i32, i32) {
    %c0_i32 = arith.constant 0 : i32
    %c0_i32_0 = arith.constant 0 : i32
    %c0_i32_1 = arith.constant 0 : i32
    return %c0_i32, %c0_i32_0 : i32, i32
  }
  func.func @transform_2(%arg0: i32, %arg1: i32) -> (i32, i32) {
    %c0_i32 = arith.constant 0 : i32
    %c0_i32_0 = arith.constant 0 : i32
    %c0_i32_1 = arith.constant 0 : i32
    return %c0_i32, %c0_i32_0 : i32, i32
  }
  func.func @transform_3(%arg0: i32, %arg1: i32) -> (i32, i32, i32, i32) {
    %c0_i32 = arith.constant 0 : i32
    %c0_i32_0 = arith.constant 0 : i32
    %c0_i32_1 = arith.constant 0 : i32
    return %arg0, %c0_i32, %arg1, %c0_i32_0 : i32, i32, i32, i32
  }
  func.func @transform_4(%arg0: i32, %arg1: i32) -> (i32, i32, i32, i32) {
    %c0_i32 = arith.constant 0 : i32
    %c0_i32_0 = arith.constant 0 : i32
    %c0_i32_1 = arith.constant 0 : i32
    return %arg0, %c0_i32, %arg1, %c0_i32_0 : i32, i32, i32, i32
  }
  func.func @transform_5(%arg0: i32, %arg1: i32) -> (i32, i32, i32, i32) {
    %c0_i32 = arith.constant 0 : i32
    %c0_i32_0 = arith.constant 0 : i32
    %c0_i32_1 = arith.constant 0 : i32
    return %arg0, %c0_i32, %arg1, %c0_i32_0 : i32, i32, i32, i32
  }
}

</mosaic_0001>

<llo_original>
// kernel: tpu_custom_call.1
$region0: #{tpu_custom_call.1}
  #allocation0 [shape = 'u32[]', space=smem, size = 0x4, offset = 0x4, fixed_abs, tag = 'smem constant byte address 0x4 - core index']
  #allocation1 [shape = 'u32[144,128]{1,0:T(1,128)}', space=vmem, size = 0x12000, scoped, tag = 'internal scratch']
  %s0 = inlined_call_operand.hbm [shape: bf16[2,8,32], index: 0, kind: input, shape index: {}]
  %s1 = inlined_call_operand.hbm [shape: bf16[32,96], index: 1, kind: input, shape index: {}]
  %s2 = inlined_call_operand.hbm [shape: f32[1,96], index: 2, kind: input, shape index: {}]
  %s3 = inlined_call_operand.hbm [shape: bf16[2,4,8,8], index: 3, kind: output, shape index: {0}]
  %s4 = inlined_call_operand.hbm [shape: bf16[2,4,8,8], index: 4, kind: output, shape index: {1}]
  %s5 = inlined_call_operand.hbm [shape: bf16[2,4,8,8], index: 5, kind: output, shape index: {2}]
  %6 = xla_tuple %s3, %s4, %s5
  %s7 = sld [smem:[#allocation0]]
  $region73: #{tpu_custom_call.1} parent=0
    _
  %s9 = ssub.s32 1, %s7
  %s10 = scalar_select 0, %s9, %s7
  $region1: #{tpu_custom_call.1} parent=0
    #allocation2 [shape = 'u8[4096]{0}', space=vmem, size = 0x1000, scoped, tag = 'input window, operand 0']
    #allocation3 [shape = 's32[2]{0}', space=sflag, size = 0x8, scoped, tag = 'scoped memory for tpu_custom_call.1']
    #allocation4 [shape = 's32[2]{0}', space=sflag, size = 0x8, scoped, tag = 'scoped memory for tpu_custom_call.1']
    #allocation5 [shape = 'u8[8192]{0}', space=vmem, size = 0x2000, scoped, tag = 'input window, operand 1, single buffered']
    #allocation6 [shape = 's32[1]{0}', space=sflag, size = 0x4, scoped, tag = 'scoped memory for tpu_custom_call.1']
    #allocation7 [shape = 'u8[512]{0}', space=vmem, size = 0x400, scoped, tag = 'input window, operand 2, single buffered']
    #allocation8 [shape = 'u8[16384]{0}', space=vmem, size = 0x4000, scoped, tag = 'output window, operand 0']
    #allocation9 [shape = 'u8[16384]{0}', space=vmem, size = 0x4000, scoped, tag = 'output window, operand 1']
    #allocation10 [shape = 's32[2]{0}', space=sflag, size = 0x8, scoped, tag = 'scoped memory for tpu_custom_call.1']
    #allocation11 [shape = 'u8[16384]{0}', space=vmem, size = 0x4000, scoped, tag = 'output window, operand 2']
    %11 = vsyncpa [#allocation3], 0
    %s12 = scalar_lea.sflag [#allocation3], 1
    %13 = vsyncpa %s12, 0
    %14 = vsyncpa [#allocation6], 0
    %15 = vsyncpa [#allocation4], 0
    %s16 = scalar_lea.sflag [#allocation4], 1
    %17 = vsyncpa %s16, 0
    %18 = vsyncpa [#allocation10], 0
    %s19 = scalar_lea.sflag [#allocation10], 1
    %20 = vsyncpa %s19, 0
    loop: start=0, step=1, limit=4
    $region2: #{tpu_custom_call.1} parent=1 // loop_pre_header
      _
    $region3: #{tpu_custom_call.1} parent=1 // loop_header
      %s22 = sphi 0, %s26
      %p23 = scmp.ge.s32.totalorder %s22, 4
      %s29 = sphi 0, %s41
      %s30 = sphi 0, %s37
      %s31 = sphi 0, %s29
      %s32 = sphi 0, %s30
      %s33 = sphi 0, %s31
      %s34 = sphi 0, %s32
      %s46 = sphi 0, %s48
      %s49 = sphi 0, %s46
      %s50 = sphi 0, %s49
      %s66 = sphi 0, %s50
      %s70 = sphi 0, %s70
      %s72 = sphi 0, %s70
      %s73 = sphi 0, %s72
      %s87 = sphi 0, %s73
      %s91 = sphi 0, %s91
      %s93 = sphi 0, %s91
      %s94 = sphi 0, %s93
      %s108 = sphi 0, %s94
      %s116 = sphi 0, %s118
      %s119 = sphi 0, %s116
      %s120 = sphi 0, %s119
      %s136 = sphi 0, %s120
      %s144 = sphi 0, %s146
      %s147 = sphi 0, %s144
      %s148 = sphi 0, %s147
      %s164 = sphi 0, %s148
      %s172 = sphi 0, %s174
      %s175 = sphi 0, %s172
      %s176 = sphi 0, %s175
      %s192 = sphi 0, %s176
    $region4: #{tpu_custom_call.1} parent=1 // loop_header_branch
      %25 = sbr.rel (%p23) target = $region8
    $region5: #{tpu_custom_call.1} parent=1 // loop_body
      %s27 = ssub.s32 %s22, 1
      %s28 = ssub.s32 %s22, 2
      %s35 = sadd.s32 1, %s30
      %p36 = scmp.ge.s32.totalorder %s35, 1
      %s37 = scalar_select %p36, 0, %s35
      %s38 = sadd.s32 1, %s29
      %s39 = scalar_select %p36, %s38, %s29
      %p40 = scmp.ge.s32.totalorder %s39, 2
      %s41 = scalar_select %p40, 0, %s39
      %s42 = ssub.s32 %s29, %s41
      %s43 = ssub.s32 %s30, %s37
      %s44 = sor.u32 %s42, %s43
      %p45 = scmp.eq.s32.totalorder %s44, 0
      %s47 = sadd.s32 %s46, 1
      %s48 = scalar_select %p45, %s46, %s47
      %p51 = pneg %p45
      %p52 = scmp.eq.s32.totalorder %s22, 1
      %p53 = por %p51, %p52
      %p54 = scmp.ne.s32.totalorder %s46, %s49
      %p55 = scmp.eq.s32.totalorder %s22, 0
      %p56 = por %p54, %p55
      %p57 = scmp.ne.s32.totalorder %s46, %s49
      %p58 = scmp.eq.s32.totalorder %s27, 1
      %p59 = por %p57, %p58
      %p60 = scmp.ne.s32.totalorder %s49, %s50
      %p61 = scmp.eq.s32.totalorder %s27, 0
      %p62 = por %p60, %p61
      %p63 = scmp.ne.s32.totalorder %s49, %s50
      %p64 = scmp.eq.s32.totalorder %s28, 1
      %p65 = por %p63, %p64
      %p67 = scmp.ne.s32.totalorder %s50, %s66
      %p68 = scmp.eq.s32.totalorder %s28, 0
      %p69 = por %p67, %p68
      %s71 = sadd.s32 %s70, 1
      %p74 = scmp.eq.s32.totalorder %s22, 1
      %p75 = scmp.ne.s32.totalorder %s70, %s72
      %p76 = scmp.eq.s32.totalorder %s22, 0
      %p77 = por %p75, %p76
      %p78 = scmp.ne.s32.totalorder %s70, %s72
      %p79 = scmp.eq.s32.totalorder %s27, 1
      %p80 = por %p78, %p79
      %p81 = scmp.ne.s32.totalorder %s72, %s73
      %p82 = scmp.eq.s32.totalorder %s27, 0
      %p83 = por %p81, %p82
      %p84 = scmp.ne.s32.totalorder %s72, %s73
      %p85 = scmp.eq.s32.totalorder %s28, 1
      %p86 = por %p84, %p85
      %p88 = scmp.ne.s32.totalorder %s73, %s87
      %p89 = scmp.eq.s32.totalorder %s28, 0
      %p90 = por %p88, %p89
      %s92 = sadd.s32 %s91, 1
      %p95 = scmp.eq.s32.totalorder %s22, 1
      %p96 = scmp.ne.s32.totalorder %s91, %s93
      %p97 = scmp.eq.s32.totalorder %s22, 0
      %p98 = por %p96, %p97
      %p99 = scmp.ne.s32.totalorder %s91, %s93
      %p100 = scmp.eq.s32.totalorder %s27, 1
      %p101 = por %p99, %p100
      %p102 = scmp.ne.s32.totalorder %s93, %s94
      %p103 = scmp.eq.s32.totalorder %s27, 0
      %p104 = por %p102, %p103
      %p105 = scmp.ne.s32.totalorder %s93, %s94
      %p106 = scmp.eq.s32.totalorder %s28, 1
      %p107 = por %p105, %p106
      %p109 = scmp.ne.s32.totalorder %s94, %s108
      %p110 = scmp.eq.s32.totalorder %s28, 0
      %p111 = por %p109, %p110
      %s112 = ssub.s32 %s29, %s41
      %s113 = ssub.s32 %s30, %s37
      %s114 = sor.u32 %s112, %s113
      %p115 = scmp.eq.s32.totalorder %s114, 0
      %s117 = sadd.s32 %s116, 1
      %s118 = scalar_select %p115, %s116, %s117
      %p121 = pneg %p115
      %p122 = scmp.eq.s32.totalorder %s22, 1
      %p123 = por %p121, %p122
      %p124 = scmp.ne.s32.totalorder %s116, %s119
      %p125 = scmp.eq.s32.totalorder %s22, 0
      %p126 = por %p124, %p125
      %p127 = scmp.ne.s32.totalorder %s116, %s119
      %p128 = scmp.eq.s32.totalorder %s27, 1
      %p129 = por %p127, %p128
      %p130 = scmp.ne.s32.totalorder %s119, %s120
      %p131 = scmp.eq.s32.totalorder %s27, 0
      %p132 = por %p130, %p131
      %p133 = scmp.ne.s32.totalorder %s119, %s120
      %p134 = scmp.eq.s32.totalorder %s28, 1
      %p135 = por %p133, %p134
      %p137 = scmp.ne.s32.totalorder %s120, %s136
      %p138 = scmp.eq.s32.totalorder %s28, 0
      %p139 = por %p137, %p138
      %s140 = ssub.s32 %s29, %s41
      %s141 = ssub.s32 %s30, %s37
      %s142 = sor.u32 %s140, %s141
      %p143 = scmp.eq.s32.totalorder %s142, 0
      %s145 = sadd.s32 %s144, 1
      %s146 = scalar_select %p143, %s144, %s145
      %p149 = pneg %p143
      %p150 = scmp.eq.s32.totalorder %s22, 1
      %p151 = por %p149, %p150
      %p152 = scmp.ne.s32.totalorder %s144, %s147
      %p153 = scmp.eq.s32.totalorder %s22, 0
      %p154 = por %p152, %p153
      %p155 = scmp.ne.s32.totalorder %s144, %s147
      %p156 = scmp.eq.s32.totalorder %s27, 1
      %p157 = por %p155, %p156
      %p158 = scmp.ne.s32.totalorder %s147, %s148
      %p159 = scmp.eq.s32.totalorder %s27, 0
      %p160 = por %p158, %p159
      %p161 = scmp.ne.s32.totalorder %s147, %s148
      %p162 = scmp.eq.s32.totalorder %s28, 1
      %p163 = por %p161, %p162
      %p165 = scmp.ne.s32.totalorder %s148, %s164
      %p166 = scmp.eq.s32.totalorder %s28, 0
      %p167 = por %p165, %p166
      %s168 = ssub.s32 %s29, %s41
      %s169 = ssub.s32 %s30, %s37
      %s170 = sor.u32 %s168, %s169
      %p171 = scmp.eq.s32.totalorder %s170, 0
      %s173 = sadd.s32 %s172, 1
      %s174 = scalar_select %p171, %s172, %s173
      %p177 = pneg %p171
      %p178 = scmp.eq.s32.totalorder %s22, 1
      %p179 = por %p177, %p178
      %p180 = scmp.ne.s32.totalorder %s172, %s175
      %p181 = scmp.eq.s32.totalorder %s22, 0
      %p182 = por %p180, %p181
      %p183 = scmp.ne.s32.totalorder %s172, %s175
      %p184 = scmp.eq.s32.totalorder %s27, 1
      %p185 = por %p183, %p184
      %p186 = scmp.ne.s32.totalorder %s175, %s176
      %p187 = scmp.eq.s32.totalorder %s27, 0
      %p188 = por %p186, %p187
      %p189 = scmp.ne.s32.totalorder %s175, %s176
      %p190 = scmp.eq.s32.totalorder %s28, 1
      %p191 = por %p189, %p190
      %p193 = scmp.ne.s32.totalorder %s176, %s192
      %p194 = scmp.eq.s32.totalorder %s28, 0
      %p195 = por %p193, %p194
      %p196 = scmp.le.s32.totalorder 1, %s22
      %p197 = scmp.lt.s32.totalorder %s22, 3
      %p198 = pnand %p196, %p197
      %p199 = pneg %p198
      // Predicated region
      $region9: #{tpu_custom_call.1} parent=5 // pred_check
        _
      $region10: #{tpu_custom_call.1} parent=5 // pred_check_branch
        %201 = sbr.rel (%p198) target = $region12
      $region11: #{tpu_custom_call.1} parent=5 // pred_region
        %s202 = ssub.s32 %s22, 1
        // Predicated region
        $region13: #{tpu_custom_call.1} parent=11 // pred_check
          %p203 = pneg %p83
        $region14: #{tpu_custom_call.1} parent=11 // pred_check_branch
          %205 = sbr.rel (%p203) target = $region16
        $region15: #{tpu_custom_call.1} parent=11 // pred_region
          %s207 = ssub.s32 256, 256
          %208 = vsyncadd [#allocation6], %s207
          %s209 = sshll.u32 [#allocation5], 4
          %s210 = int_to_ptr.vmem [resolvable:$true] %s209
          %215 = dma.hbm_to_vmem [thread:$0]  %s1, 256, %s210, [#allocation6], 64, 64, 4
        $region16: #{tpu_custom_call.1} parent=11 // pred_fallthru
          _
        // Predicated region
        $region17: #{tpu_custom_call.1} parent=11 // pred_check
          %p216 = pneg %p104
        $region18: #{tpu_custom_call.1} parent=11 // pred_check_branch
          %218 = sbr.rel (%p216) target = $region20
        $region19: #{tpu_custom_call.1} parent=11 // pred_region
          %s220 = ssub.s32 16, 16
          %221 = vsyncadd [#allocation6], %s220
          %s223 = sshll.u32 [#allocation7], 4
          %s224 = int_to_ptr.vmem [resolvable:$true] %s223
          %226 = dma.hbm_to_vmem [thread:$0]  %s2, 16, %s224, [#allocation6]
        $region20: #{tpu_custom_call.1} parent=11 // pred_fallthru
          _
      $region12: #{tpu_custom_call.1} parent=5 // pred_fallthru
        _
      %p227 = scmp.lt.s32.totalorder %s22, 2
      // Predicated region
      $region21: #{tpu_custom_call.1} parent=5 // pred_check
        %p228 = pneg %p227
      $region22: #{tpu_custom_call.1} parent=5 // pred_check_branch
        %230 = sbr.rel (%p228) target = $region24
      $region23: #{tpu_custom_call.1} parent=5 // pred_region
        // Predicated region
        $region25: #{tpu_custom_call.1} parent=23 // pred_check
          %p231 = pneg %p56
        $region26: #{tpu_custom_call.1} parent=23 // pred_check_branch
          %233 = sbr.rel (%p231) target = $region28
        $region27: #{tpu_custom_call.1} parent=23 // pred_region
          %s234 = sand.u32 %s46, 1
          %s235 = scalar_lea.sflag [#allocation3], %s234
          %s236 = sand.u32 %s46, 1
          %s237 = smul.addr %s236, 4
          %s238 = scalar_lea.vmem [#allocation2], %s237
          %s240 = ssub.s32 64, 64
          %241 = vsyncadd %s235, %s240
          %s242 = sadd.s32 %s30, %s29
          %s243 = smul.addr %s242, 64
          %s244 = scalar_lea.hbm %s0, %s243
          %s246 = sshll.u32 %s238, 4
          %s247 = int_to_ptr.vmem [resolvable:$true] %s246
          %249 = dma.hbm_to_vmem [thread:$0]  %s244, 64, %s247, %s235
        $region28: #{tpu_custom_call.1} parent=23 // pred_fallthru
          _
      $region24: #{tpu_custom_call.1} parent=5 // pred_fallthru
        _
      %p250 = scmp.le.s32.totalorder 1, %s22
      %p251 = scmp.lt.s32.totalorder %s22, 3
      %p252 = pnand %p250, %p251
      %p253 = pneg %p252
      // Predicated region
      $region29: #{tpu_custom_call.1} parent=5 // pred_check
        _
      $region30: #{tpu_custom_call.1} parent=5 // pred_check_branch
        %255 = sbr.rel (%p252) target = $region32
      $region31: #{tpu_custom_call.1} parent=5 // pred_region
        %s256 = ssub.s32 %s22, 1
        %s257 = sand.u32 %s49, 1
        %s258 = scalar_lea.sflag [#allocation3], %s257
        %s259 = sand.u32 %s49, 1
        %s260 = smul.addr %s259, 4
        %s261 = scalar_lea.vmem [#allocation2], %s260
        // Predicated region
        $region33: #{tpu_custom_call.1} parent=31 // pred_check
          %p262 = pneg %p62
        $region34: #{tpu_custom_call.1} parent=31 // pred_check_branch
          %264 = sbr.rel (%p262) target = $region36
        $region35: #{tpu_custom_call.1} parent=31 // pred_region
          %265 = dma.done %s258, 64
        $region36: #{tpu_custom_call.1} parent=31 // pred_fallthru
          _
        // Predicated region
        $region37: #{tpu_custom_call.1} parent=31 // pred_check
          %p266 = pneg %p83
        $region38: #{tpu_custom_call.1} parent=31 // pred_check_branch
          %268 = sbr.rel (%p266) target = $region40
        $region39: #{tpu_custom_call.1} parent=31 // pred_region
          %269 = dma.done [#allocation6], 256
        $region40: #{tpu_custom_call.1} parent=31 // pred_fallthru
          _
        // Predicated region
        $region41: #{tpu_custom_call.1} parent=31 // pred_check
          %p270 = pneg %p104
        $region42: #{tpu_custom_call.1} parent=31 // pred_check_branch
          %272 = sbr.rel (%p270) target = $region44
        $region43: #{tpu_custom_call.1} parent=31 // pred_region
          %273 = dma.done [#allocation6], 16
        $region44: #{tpu_custom_call.1} parent=31 // pred_fallthru
          _
        %s274 = sand.u32 %s49, 1
        %s275 = scalar_lea.sflag [#allocation3], %s274
        %s276 = sand.u32 %s49, 1
        %s277 = smul.addr %s276, 4
        %s278 = scalar_lea.vmem [#allocation2], %s277
        %p279 = pneg %p62
        %p280 = pneg %p59
        %p281 = pneg %p83
        %p282 = pneg %p80
        %p283 = pneg %p104
        %p284 = pneg %p101
        %p285 = pneg %p132
        %p286 = pneg %p129
        %s287 = sand.u32 %s119, 1
        %s288 = scalar_lea.sflag [#allocation4], %s287
        %s289 = sand.u32 %s119, 1
        %s290 = smul.addr %s289, 16
        %s291 = scalar_lea.vmem [#allocation8], %s290
        %p292 = pneg %p160
        %p293 = pneg %p157
        %s294 = sand.u32 %s27, 1
        %s295 = scalar_lea.sflag [#allocation10], %s294
        %s296 = sand.u32 %s147, 1
        %s297 = smul.addr %s296, 16
        %s298 = scalar_lea.vmem [#allocation9], %s297
        %p299 = pneg %p188
        %p300 = pneg %p185
        %s301 = sand.u32 %s27, 1
        %s302 = scalar_lea.sflag [#allocation10], %s301
        %s303 = sand.u32 %s175, 1
        %s304 = smul.addr %s303, 16
        %s305 = scalar_lea.vmem [#allocation11], %s304
        %v307 = vld [vmem:[%s261] sm:$0xf]
        %v308 = vld [vmem:[#allocation5] sm:$0xf]
        %v309 = vld [vmem:[#allocation5 + $0x4] sm:$0xf]
        %v310 = vld [vmem:[#allocation5 + $0x8] sm:$0xf]
        %v311 = vld [vmem:[#allocation5 + $0xc] sm:$0xf]
        %v312 = vld [vmem:[#allocation7] sm:$0x1]
        %v314 = vlaneseq
        %v315 = vshrl.u32 %v314, 7
        %v316 = vsub.s32 0, %v315
        %v317 = vrot.slane %v312, %v316
        %v323 = vunpack.c.l.b16 %v308
        %v324 = vunpack.c.l.b16 %v309
        %v325 = vunpack.c.l.b16 %v310
        %v326 = vunpack.c.l.b16 %v311
        %v327 = vpack.c.b16 %v324, %v323
        %v328 = vpack.c.b16 %v326, %v325
        %vm331 = vcmask 261120
        %v333 = vsel %vm331, %v307, 0
        %335 = vmatprep.subr.bf16.mxu0 0
        %336 = vmatpush1.bf16.msra.mxu0 %v327
        %337 = vmatprep.subr.bf16.mxu0 0
        %338 = vmatpush1.bf16.msra.mxu0 %v328
        %339 = vmatprep.subr.bf16.mxu0 0
        %340 = vmatpush1.bf16.msra.mxu0 0
        %341 = vmatprep.subr.bf16.mxu0 0
        %342 = vmatpush1.bf16.msra.mxu0 0
        %343 = vmatprep.subr.bf16.mxu0 0
        %344 = vmatpush1.bf16.msra.mxu0 0
        %345 = vmatprep.subr.bf16.mxu0 0
        %346 = vmatpush1.bf16.msra.mxu0 0
        %347 = vmatprep.subr.bf16.mxu0 0
        %348 = vmatpush1.bf16.msra.mxu0 0
        %349 = vmatprep.subr.bf16.mxu0 0
        %350 = vmatpush1.bf16.msra.mxu0 0
        %351 = vmatprep.subr.bf16.mxu0 0
        %352 = vmatpush1.bf16.msra.mxu0 0
        %353 = vmatprep.subr.bf16.mxu0 0
        %354 = vmatpush1.bf16.msra.mxu0 0
        %355 = vmatprep.subr.bf16.mxu0 0
        %356 = vmatpush1.bf16.msra.mxu0 0
        %357 = vmatprep.subr.bf16.mxu0 0
        %358 = vmatpush1.bf16.msra.mxu0 0
        %359 = vmatprep.subr.bf16.mxu0 0
        %360 = vmatpush1.bf16.msra.mxu0 0
        %361 = vmatprep.subr.bf16.mxu0 0
        %362 = vmatpush1.bf16.msra.mxu0 0
        %363 = vmatprep.subr.bf16.mxu0 0
        %364 = vmatpush1.bf16.msra.mxu0 0
        %365 = vmatprep.subr.bf16.mxu0 0
        %366 = vmatpush1.bf16.msra.mxu0 0
        %367 = vmatprep.mubr.bf16.mxu0 0
        %368 = vmatmul.mubr.bf16.gmra.mrb[0].mxu0 %v333
        %v369 = vpop.f32.mrb[0].mxu0
        %v370 = vadd.f32 %v317, %v369
        %v371 = vpop.f32.mrb[0].mxu0
        %v372 = vpop.f32.mrb[0].mxu0
        %v373 = vpop.f32.mrb[0].mxu0
        %374 = vdwg.mxu0
        %376 = vrot.lane.b32.xlu0 %v370, 120
        %v377 = vpop.permute.xlu0 %376
        %379 = vrot.lane.b32.xlu0 %v370, 112
        %v380 = vpop.permute.xlu0 %379
        %382 = vrot.lane.b32.xlu0 %v370, 104
        %v383 = vpop.permute.xlu0 %382
        %v385 = vcombine.low %v370, %v380
        %v386 = vcombine.high %v370, %v380
        %v388 = vunpack.c.l.s4 1983009808
        %v389 = vunpack.c.0.s8 %v388
        %v390 = vlaneseq
        %v391 = vshrl.u32 %v390, 7
        %v392 = vsub.s32 %v389, %v391
        %v393 = vrot.slane %v385, %v392
        %v395 = vunpack.c.l.s4 1983009808
        %v396 = vunpack.c.0.s8 %v395
        %v397 = vlaneseq
        %v398 = vshrl.u32 %v397, 7
        %v399 = vsub.s32 %v396, %v398
        %v400 = vrot.slane %v386, %v399
        %v401 = vcombine.low %v377, %v383
        %v402 = vcombine.high %v377, %v383
        %v404 = vunpack.c.l.s4 1983009808
        %v405 = vunpack.c.0.s8 %v404
        %v406 = vlaneseq
        %v407 = vshrl.u32 %v406, 7
        %v408 = vsub.s32 %v405, %v407
        %v409 = vrot.slane %v401, %v408
        %v411 = vunpack.c.l.s4 1983009808
        %v412 = vunpack.c.0.s8 %v411
        %v413 = vlaneseq
        %v414 = vshrl.u32 %v413, 7
        %v415 = vsub.s32 %v412, %v414
        %v416 = vrot.slane %v402, %v415
        %v417 = vcombine.low %v393, %v409
        %v418 = vcombine.high %v393, %v409
        %v420 = vunpack.c.l.s4 1934713408
        %v421 = vunpack.c.0.s8 %v420
        %v422 = vlaneseq
        %v423 = vshrl.u32 %v422, 7
        %v424 = vsub.s32 %v421, %v423
        %v425 = vrot.slane %v417, %v424
        %v427 = vunpack.c.l.s4 1934713408
        %v428 = vunpack.c.0.s8 %v427
        %v429 = vlaneseq
        %v430 = vshrl.u32 %v429, 7
        %v431 = vsub.s32 %v428, %v430
        %v432 = vrot.slane %v418, %v431
        %v433 = vcombine.low %v400, %v416
        %v434 = vcombine.high %v400, %v416
        %v436 = vunpack.c.l.s4 1934713408
        %v437 = vunpack.c.0.s8 %v436
        %v438 = vlaneseq
        %v439 = vshrl.u32 %v438, 7
        %v440 = vsub.s32 %v437, %v439
        %v441 = vrot.slane %v433, %v440
        %v443 = vunpack.c.l.s4 1934713408
        %v444 = vunpack.c.0.s8 %v443
        %v445 = vlaneseq
        %v446 = vshrl.u32 %v445, 7
        %v447 = vsub.s32 %v444, %v446
        %v448 = vrot.slane %v434, %v447
        %v449 = vcombine.high %v425, 0.0
        %v450 = vcombine.high %v432, 0.0
        %v451 = vcombine.high %v441, 0.0
        %v452 = vcombine.high %v448, 0.0
        %v453 = vcombine.low %v425, %v432
        %v455 = vunpack.c.l.s4 1983009808
        %v456 = vunpack.c.0.s8 %v455
        %v457 = vlaneseq
        %v458 = vshrl.u32 %v457, 7
        %v459 = vsub.s32 %v456, %v458
        %v460 = vrot.slane %v453, %v459
        %v461 = vcombine.low %v449, %v450
        %v463 = vunpack.c.l.s4 1983009808
        %v464 = vunpack.c.0.s8 %v463
        %v465 = vlaneseq
        %v466 = vshrl.u32 %v465, 7
        %v467 = vsub.s32 %v464, %v466
        %v468 = vrot.slane %v461, %v467
        %v469 = vcombine.low %v441, %v448
        %v471 = vunpack.c.l.s4 1983009808
        %v472 = vunpack.c.0.s8 %v471
        %v473 = vlaneseq
        %v474 = vshrl.u32 %v473, 7
        %v475 = vsub.s32 %v472, %v474
        %v476 = vrot.slane %v469, %v475
        %v477 = vcombine.low %v451, %v452
        %v479 = vunpack.c.l.s4 1983009808
        %v480 = vunpack.c.0.s8 %v479
        %v481 = vlaneseq
        %v482 = vshrl.u32 %v481, 7
        %v483 = vsub.s32 %v480, %v482
        %v484 = vrot.slane %v477, %v483
        %v485 = vcombine.low %v460, %v468
        %v486 = vcombine.high %v460, %v468
        %v488 = vunpack.c.l.s4 1934713408
        %v489 = vunpack.c.0.s8 %v488
        %v490 = vlaneseq
        %v491 = vshrl.u32 %v490, 7
        %v492 = vsub.s32 %v489, %v491
        %v493 = vrot.slane %v485, %v492
        %v495 = vunpack.c.l.s4 1934713408
        %v496 = vunpack.c.0.s8 %v495
        %v497 = vlaneseq
        %v498 = vshrl.u32 %v497, 7
        %v499 = vsub.s32 %v496, %v498
        %v500 = vrot.slane %v486, %v499
        %v501 = vcombine.low %v476, %v484
        %v502 = vcombine.high %v476, %v484
        %v504 = vunpack.c.l.s4 1934713408
        %v505 = vunpack.c.0.s8 %v504
        %v506 = vlaneseq
        %v507 = vshrl.u32 %v506, 7
        %v508 = vsub.s32 %v505, %v507
        %v509 = vrot.slane %v501, %v508
        %v511 = vunpack.c.l.s4 1934713408
        %v512 = vunpack.c.0.s8 %v511
        %v513 = vlaneseq
        %v514 = vshrl.u32 %v513, 7
        %v515 = vsub.s32 %v512, %v514
        %v516 = vrot.slane %v502, %v515
        %v517 = vcombine.low %v493, %v509
        %v518 = vcombine.high %v493, %v509
        %v519 = vcombine.low %v500, %v516
        %v520 = vcombine.high %v500, %v516
        %v521 = vpack.c.bf16 %v517, %v517
        %v522 = vpack.c.bf16 %v518, %v518
        %v523 = vpack.c.bf16 %v519, %v519
        %v524 = vpack.c.bf16 %v520, %v520
        %vm525 = vcmask 60416
        %526 = vst.msk [vmem:[%s291] sm:$0xf] %vm525, %v521
        %527 = vst.msk [vmem:[%s291 + $0x4] sm:$0xf] %vm525, %v522
        %528 = vst.msk [vmem:[%s291 + $0x8] sm:$0xf] %vm525, %v523
        %529 = vst.msk [vmem:[%s291 + $0xc] sm:$0xf] %vm525, %v524
        %530 = vrot.lane.b32.xlu0 %v370, 96
        %v531 = vpop.permute.xlu0 %530
        %532 = vrot.lane.b32.xlu0 %v377, 96
        %v533 = vpop.permute.xlu0 %532
        %534 = vrot.lane.b32.xlu0 %v380, 96
        %v535 = vpop.permute.xlu0 %534
        %536 = vrot.lane.b32.xlu0 %v383, 96
        %v537 = vpop.permute.xlu0 %536
        %v542 = vcombine.low %v531, %v535
        %v543 = vcombine.high %v531, %v535
        %v545 = vunpack.c.l.s4 1983009808
        %v546 = vunpack.c.0.s8 %v545
        %v547 = vlaneseq
        %v548 = vshrl.u32 %v547, 7
        %v549 = vsub.s32 %v546, %v548
        %v550 = vrot.slane %v542, %v549
        %v552 = vunpack.c.l.s4 1983009808
        %v553 = vunpack.c.0.s8 %v552
        %v554 = vlaneseq
        %v555 = vshrl.u32 %v554, 7
        %v556 = vsub.s32 %v553, %v555
        %v557 = vrot.slane %v543, %v556
        %v558 = vcombine.low %v533, %v537
        %v559 = vcombine.high %v533, %v537
        %v561 = vunpack.c.l.s4 1983009808
        %v562 = vunpack.c.0.s8 %v561
        %v563 = vlaneseq
        %v564 = vshrl.u32 %v563, 7
        %v565 = vsub.s32 %v562, %v564
        %v566 = vrot.slane %v558, %v565
        %v568 = vunpack.c.l.s4 1983009808
        %v569 = vunpack.c.0.s8 %v568
        %v570 = vlaneseq
        %v571 = vshrl.u32 %v570, 7
        %v572 = vsub.s32 %v569, %v571
        %v573 = vrot.slane %v559, %v572
        %v574 = vcombine.low %v550, %v566
        %v575 = vcombine.high %v550, %v566
        %v577 = vunpack.c.l.s4 1934713408
        %v578 = vunpack.c.0.s8 %v577
        %v579 = vlaneseq
        %v580 = vshrl.u32 %v579, 7
        %v581 = vsub.s32 %v578, %v580
        %v582 = vrot.slane %v574, %v581
        %v584 = vunpack.c.l.s4 1934713408
        %v585 = vunpack.c.0.s8 %v584
        %v586 = vlaneseq
        %v587 = vshrl.u32 %v586, 7
        %v588 = vsub.s32 %v585, %v587
        %v589 = vrot.slane %v575, %v588
        %v590 = vcombine.low %v557, %v573
        %v591 = vcombine.high %v557, %v573
        %v593 = vunpack.c.l.s4 1934713408
        %v594 = vunpack.c.0.s8 %v593
        %v595 = vlaneseq
        %v596 = vshrl.u32 %v595, 7
        %v597 = vsub.s32 %v594, %v596
        %v598 = vrot.slane %v590, %v597
        %v600 = vunpack.c.l.s4 1934713408
        %v601 = vunpack.c.0.s8 %v600
        %v602 = vlaneseq
        %v603 = vshrl.u32 %v602, 7
        %v604 = vsub.s32 %v601, %v603
        %v605 = vrot.slane %v591, %v604
        %v606 = vcombine.high %v582, 0.0
        %v607 = vcombine.high %v589, 0.0
        %v608 = vcombine.high %v598, 0.0
        %v609 = vcombine.high %v605, 0.0
        %v610 = vcombine.low %v582, %v589
        %v612 = vunpack.c.l.s4 1983009808
        %v613 = vunpack.c.0.s8 %v612
        %v614 = vlaneseq
        %v615 = vshrl.u32 %v614, 7
        %v616 = vsub.s32 %v613, %v615
        %v617 = vrot.slane %v610, %v616
        %v618 = vcombine.low %v606, %v607
        %v620 = vunpack.c.l.s4 1983009808
        %v621 = vunpack.c.0.s8 %v620
        %v622 = vlaneseq
        %v623 = vshrl.u32 %v622, 7
        %v624 = vsub.s32 %v621, %v623
        %v625 = vrot.slane %v618, %v624
        %v626 = vcombine.low %v598, %v605
        %v628 = vunpack.c.l.s4 1983009808
        %v629 = vunpack.c.0.s8 %v628
        %v630 = vlaneseq
        %v631 = vshrl.u32 %v630, 7
        %v632 = vsub.s32 %v629, %v631
        %v633 = vrot.slane %v626, %v632
        %v634 = vcombine.low %v608, %v609
        %v636 = vunpack.c.l.s4 1983009808
        %v637 = vunpack.c.0.s8 %v636
        %v638 = vlaneseq
        %v639 = vshrl.u32 %v638, 7
        %v640 = vsub.s32 %v637, %v639
        %v641 = vrot.slane %v634, %v640
        %v642 = vcombine.low %v617, %v625
        %v643 = vcombine.high %v617, %v625
        %v645 = vunpack.c.l.s4 1934713408
        %v646 = vunpack.c.0.s8 %v645
        %v647 = vlaneseq
        %v648 = vshrl.u32 %v647, 7
        %v649 = vsub.s32 %v646, %v648
        %v650 = vrot.slane %v642, %v649
        %v652 = vunpack.c.l.s4 1934713408
        %v653 = vunpack.c.0.s8 %v652
        %v654 = vlaneseq
        %v655 = vshrl.u32 %v654, 7
        %v656 = vsub.s32 %v653, %v655
        %v657 = vrot.slane %v643, %v656
        %v658 = vcombine.low %v633, %v641
        %v659 = vcombine.high %v633, %v641
        %v661 = vunpack.c.l.s4 1934713408
        %v662 = vunpack.c.0.s8 %v661
        %v663 = vlaneseq
        %v664 = vshrl.u32 %v663, 7
        %v665 = vsub.s32 %v662, %v664
        %v666 = vrot.slane %v658, %v665
        %v668 = vunpack.c.l.s4 1934713408
        %v669 = vunpack.c.0.s8 %v668
        %v670 = vlaneseq
        %v671 = vshrl.u32 %v670, 7
        %v672 = vsub.s32 %v669, %v671
        %v673 = vrot.slane %v659, %v672
        %v674 = vcombine.low %v650, %v666
        %v675 = vcombine.high %v650, %v666
        %v676 = vcombine.low %v657, %v673
        %v677 = vcombine.high %v657, %v673
        %v678 = vpack.c.bf16 %v674, %v674
        %v679 = vpack.c.bf16 %v675, %v675
        %v680 = vpack.c.bf16 %v676, %v676
        %v681 = vpack.c.bf16 %v677, %v677
        %682 = vst.msk [vmem:[%s298] sm:$0xf] %vm525, %v678
        %683 = vst.msk [vmem:[%s298 + $0x4] sm:$0xf] %vm525, %v679
        %684 = vst.msk [vmem:[%s298 + $0x8] sm:$0xf] %vm525, %v680
        %685 = vst.msk [vmem:[%s298 + $0xc] sm:$0xf] %vm525, %v681
        %686 = vrot.lane.b32.xlu0 %v370, 64
        %v687 = vpop.permute.xlu0 %686
        %688 = vrot.lane.b32.xlu0 %v377, 64
        %v689 = vpop.permute.xlu0 %688
        %690 = vrot.lane.b32.xlu0 %v380, 64
        %v691 = vpop.permute.xlu0 %690
        %692 = vrot.lane.b32.xlu0 %v383, 64
        %v693 = vpop.permute.xlu0 %692
        %v698 = vcombine.low %v687, %v691
        %v699 = vcombine.high %v687, %v691
        %v701 = vunpack.c.l.s4 1983009808
        %v702 = vunpack.c.0.s8 %v701
        %v703 = vlaneseq
        %v704 = vshrl.u32 %v703, 7
        %v705 = vsub.s32 %v702, %v704
        %v706 = vrot.slane %v698, %v705
        %v708 = vunpack.c.l.s4 1983009808
        %v709 = vunpack.c.0.s8 %v708
        %v710 = vlaneseq
        %v711 = vshrl.u32 %v710, 7
        %v712 = vsub.s32 %v709, %v711
        %v713 = vrot.slane %v699, %v712
        %v714 = vcombine.low %v689, %v693
        %v715 = vcombine.high %v689, %v693
        %v717 = vunpack.c.l.s4 1983009808
        %v718 = vunpack.c.0.s8 %v717
        %v719 = vlaneseq
        %v720 = vshrl.u32 %v719, 7
        %v721 = vsub.s32 %v718, %v720
        %v722 = vrot.slane %v714, %v721
        %v724 = vunpack.c.l.s4 1983009808
        %v725 = vunpack.c.0.s8 %v724
        %v726 = vlaneseq
        %v727 = vshrl.u32 %v726, 7
        %v728 = vsub.s32 %v725, %v727
        %v729 = vrot.slane %v715, %v728
        %v730 = vcombine.low %v706, %v722
        %v731 = vcombine.high %v706, %v722
        %v733 = vunpack.c.l.s4 1934713408
        %v734 = vunpack.c.0.s8 %v733
        %v735 = vlaneseq
        %v736 = vshrl.u32 %v735, 7
        %v737 = vsub.s32 %v734, %v736
        %v738 = vrot.slane %v730, %v737
        %v740 = vunpack.c.l.s4 1934713408
        %v741 = vunpack.c.0.s8 %v740
        %v742 = vlaneseq
        %v743 = vshrl.u32 %v742, 7
        %v744 = vsub.s32 %v741, %v743
        %v745 = vrot.slane %v731, %v744
        %v746 = vcombine.low %v713, %v729
        %v747 = vcombine.high %v713, %v729
        %v749 = vunpack.c.l.s4 1934713408
        %v750 = vunpack.c.0.s8 %v749
        %v751 = vlaneseq
        %v752 = vshrl.u32 %v751, 7
        %v753 = vsub.s32 %v750, %v752
        %v754 = vrot.slane %v746, %v753
        %v756 = vunpack.c.l.s4 1934713408
        %v757 = vunpack.c.0.s8 %v756
        %v758 = vlaneseq
        %v759 = vshrl.u32 %v758, 7
        %v760 = vsub.s32 %v757, %v759
        %v761 = vrot.slane %v747, %v760
        %v762 = vcombine.high %v738, 0.0
        %v763 = vcombine.high %v745, 0.0
        %v764 = vcombine.high %v754, 0.0
        %v765 = vcombine.high %v761, 0.0
        %v766 = vcombine.low %v738, %v745
        %v768 = vunpack.c.l.s4 1983009808
        %v769 = vunpack.c.0.s8 %v768
        %v770 = vlaneseq
        %v771 = vshrl.u32 %v770, 7
        %v772 = vsub.s32 %v769, %v771
        %v773 = vrot.slane %v766, %v772
        %v774 = vcombine.low %v762, %v763
        %v776 = vunpack.c.l.s4 1983009808
        %v777 = vunpack.c.0.s8 %v776
        %v778 = vlaneseq
        %v779 = vshrl.u32 %v778, 7
        %v780 = vsub.s32 %v777, %v779
        %v781 = vrot.slane %v774, %v780
        %v782 = vcombine.low %v754, %v761
        %v784 = vunpack.c.l.s4 1983009808
        %v785 = vunpack.c.0.s8 %v784
        %v786 = vlaneseq
        %v787 = vshrl.u32 %v786, 7
        %v788 = vsub.s32 %v785, %v787
        %v789 = vrot.slane %v782, %v788
        %v790 = vcombine.low %v764, %v765
        %v792 = vunpack.c.l.s4 1983009808
        %v793 = vunpack.c.0.s8 %v792
        %v794 = vlaneseq
        %v795 = vshrl.u32 %v794, 7
        %v796 = vsub.s32 %v793, %v795
        %v797 = vrot.slane %v790, %v796
        %v798 = vcombine.low %v773, %v781
        %v799 = vcombine.high %v773, %v781
        %v801 = vunpack.c.l.s4 1934713408
        %v802 = vunpack.c.0.s8 %v801
        %v803 = vlaneseq
        %v804 = vshrl.u32 %v803, 7
        %v805 = vsub.s32 %v802, %v804
        %v806 = vrot.slane %v798, %v805
        %v808 = vunpack.c.l.s4 1934713408
        %v809 = vunpack.c.0.s8 %v808
        %v810 = vlaneseq
        %v811 = vshrl.u32 %v810, 7
        %v812 = vsub.s32 %v809, %v811
        %v813 = vrot.slane %v799, %v812
        %v814 = vcombine.low %v789, %v797
        %v815 = vcombine.high %v789, %v797
        %v817 = vunpack.c.l.s4 1934713408
        %v818 = vunpack.c.0.s8 %v817
        %v819 = vlaneseq
        %v820 = vshrl.u32 %v819, 7
        %v821 = vsub.s32 %v818, %v820
        %v822 = vrot.slane %v814, %v821
        %v824 = vunpack.c.l.s4 1934713408
        %v825 = vunpack.c.0.s8 %v824
        %v826 = vlaneseq
        %v827 = vshrl.u32 %v826, 7
        %v828 = vsub.s32 %v825, %v827
        %v829 = vrot.slane %v815, %v828
        %v830 = vcombine.low %v806, %v822
        %v831 = vcombine.high %v806, %v822
        %v832 = vcombine.low %v813, %v829
        %v833 = vcombine.high %v813, %v829
        %v834 = vpack.c.bf16 %v830, %v830
        %v835 = vpack.c.bf16 %v831, %v831
        %v836 = vpack.c.bf16 %v832, %v832
        %v837 = vpack.c.bf16 %v833, %v833
        %838 = vst.msk [vmem:[%s305] sm:$0xf] %vm525, %v834
        %839 = vst.msk [vmem:[%s305 + $0x4] sm:$0xf] %vm525, %v835
        %840 = vst.msk [vmem:[%s305 + $0x8] sm:$0xf] %vm525, %v836
        %841 = vst.msk [vmem:[%s305 + $0xc] sm:$0xf] %vm525, %v837
        %s842 = sand.u32 %s119, 1
        %s843 = scalar_lea.sflag [#allocation4], %s842
        %s844 = sand.u32 %s119, 1
        %s845 = smul.addr %s844, 16
        %s846 = scalar_lea.vmem [#allocation8], %s845
        %s847 = sand.u32 %s27, 1
        %s848 = scalar_lea.sflag [#allocation10], %s847
        %s849 = sand.u32 %s147, 1
        %s850 = smul.addr %s849, 16
        %s851 = scalar_lea.vmem [#allocation9], %s850
        %s852 = sand.u32 %s27, 1
        %s853 = scalar_lea.sflag [#allocation10], %s852
        %s854 = sand.u32 %s175, 1
        %s855 = smul.addr %s854, 16
        %s856 = scalar_lea.vmem [#allocation11], %s855
        // Predicated region
        $region45: #{tpu_custom_call.1} parent=31 // pred_check
          %p857 = pneg %p129
        $region46: #{tpu_custom_call.1} parent=31 // pred_check_branch
          %859 = sbr.rel (%p857) target = $region48
        $region47: #{tpu_custom_call.1} parent=31 // pred_region
          %s861 = ssub.s32 256, 256
          %862 = vsyncadd %s843, %s861
          %s863 = smul.addr %s31, 4
          %s864 = sadd.s32 %s32, %s863
          %s865 = smul.addr %s864, 64
          %s866 = scalar_lea.hbm %s3, %s865
          %s867 = sshll.u32 %s846, 4
          %s868 = int_to_ptr.vmem [resolvable:$true] %s867
          %873 = dma.vmem_to_hbm [thread:$0]  %s868, 256, %s866, %s843, 64, 64, 4
        $region48: #{tpu_custom_call.1} parent=31 // pred_fallthru
          _
        // Predicated region
        $region49: #{tpu_custom_call.1} parent=31 // pred_check
          %p874 = pneg %p157
        $region50: #{tpu_custom_call.1} parent=31 // pred_check_branch
          %876 = sbr.rel (%p874) target = $region52
        $region51: #{tpu_custom_call.1} parent=31 // pred_region
          %s878 = ssub.s32 256, 256
          %879 = vsyncadd %s848, %s878
          %s880 = smul.addr %s31, 4
          %s881 = sadd.s32 %s32, %s880
          %s882 = smul.addr %s881, 64
          %s883 = scalar_lea.hbm %s4, %s882
          %s884 = sshll.u32 %s851, 4
          %s885 = int_to_ptr.vmem [resolvable:$true] %s884
          %890 = dma.vmem_to_hbm [thread:$0]  %s885, 256, %s883, %s848, 64, 64, 4
        $region52: #{tpu_custom_call.1} parent=31 // pred_fallthru
          _
        // Predicated region
        $region53: #{tpu_custom_call.1} parent=31 // pred_check
          %p891 = pneg %p185
        $region54: #{tpu_custom_call.1} parent=31 // pred_check_branch
          %893 = sbr.rel (%p891) target = $region56
        $region55: #{tpu_custom_call.1} parent=31 // pred_region
          %s895 = ssub.s32 256, 256
          %896 = vsyncadd %s853, %s895
          %s897 = smul.addr %s31, 4
          %s898 = sadd.s32 %s32, %s897
          %s899 = smul.addr %s898, 64
          %s900 = scalar_lea.hbm %s5, %s899
          %s901 = sshll.u32 %s856, 4
          %s902 = int_to_ptr.vmem [resolvable:$true] %s901
          %907 = dma.vmem_to_hbm [thread:$0]  %s902, 256, %s900, %s853, 64, 64, 4
        $region56: #{tpu_custom_call.1} parent=31 // pred_fallthru
          _
      $region32: #{tpu_custom_call.1} parent=5 // pred_fallthru
        _
      %p908 = scmp.le.s32.totalorder 2, %s22
      // Predicated region
      $region57: #{tpu_custom_call.1} parent=5 // pred_check
        %p909 = pneg %p908
      $region58: #{tpu_custom_call.1} parent=5 // pred_check_branch
        %911 = sbr.rel (%p909) target = $region60
      $region59: #{tpu_custom_call.1} parent=5 // pred_region
        %s912 = ssub.s32 %s22, 2
        // Predicated region
        $region61: #{tpu_custom_call.1} parent=59 // pred_check
          %p913 = pneg %p135
        $region62: #{tpu_custom_call.1} parent=59 // pred_check_branch
          %915 = sbr.rel (%p913) target = $region64
        $region63: #{tpu_custom_call.1} parent=59 // pred_region
          %s916 = sand.u32 %s120, 1
          %s917 = scalar_lea.sflag [#allocation4], %s916
          %s918 = sand.u32 %s120, 1
          %s919 = smul.addr %s918, 16
          %s920 = scalar_lea.vmem [#allocation8], %s919
          %921 = dma.done %s917, 256
        $region64: #{tpu_custom_call.1} parent=59 // pred_fallthru
          _
        // Predicated region
        $region65: #{tpu_custom_call.1} parent=59 // pred_check
          %p922 = pneg %p163
        $region66: #{tpu_custom_call.1} parent=59 // pred_check_branch
          %924 = sbr.rel (%p922) target = $region68
        $region67: #{tpu_custom_call.1} parent=59 // pred_region
          %s925 = sand.u32 %s28, 1
          %s926 = scalar_lea.sflag [#allocation10], %s925
          %s927 = sand.u32 %s148, 1
          %s928 = smul.addr %s927, 16
          %s929 = scalar_lea.vmem [#allocation9], %s928
          %930 = dma.done %s926, 256
        $region68: #{tpu_custom_call.1} parent=59 // pred_fallthru
          _
        // Predicated region
        $region69: #{tpu_custom_call.1} parent=59 // pred_check
          %p931 = pneg %p191
        $region70: #{tpu_custom_call.1} parent=59 // pred_check_branch
          %933 = sbr.rel (%p931) target = $region72
        $region71: #{tpu_custom_call.1} parent=59 // pred_region
          %s934 = sand.u32 %s28, 1
          %s935 = scalar_lea.sflag [#allocation10], %s934
          %s936 = sand.u32 %s176, 1
          %s937 = smul.addr %s936, 16
          %s938 = scalar_lea.vmem [#allocation11], %s937
          %939 = dma.done %s935, 256
        $region72: #{tpu_custom_call.1} parent=59 // pred_fallthru
          _
      $region60: #{tpu_custom_call.1} parent=5 // pred_fallthru
        _
    $region6: #{tpu_custom_call.1} parent=1 // loop_footer
      %s26 = sadd.s32 1, %s22
    $region7: #{tpu_custom_call.1} parent=1 // loop_footer_branch
      %21 = sbr.rel target = $region3
    $region8: #{tpu_custom_call.1} parent=1 // loop_exit
      _
    %940 = vsyncpa [#allocation3], 1
    %s941 = scalar_lea.sflag [#allocation3], 1
    %942 = vsyncpa %s941, 1
    %943 = vsyncpa [#allocation6], 1
    %944 = vsyncpa [#allocation4], 1
    %s945 = scalar_lea.sflag [#allocation4], 1
    %946 = vsyncpa %s945, 1
    %947 = vsyncpa [#allocation10], 1
    %s948 = scalar_lea.sflag [#allocation10], 1
    %949 = vsyncpa %s948, 1

</llo_original>
